<compile_context>
chip_gen: v7x
topology: tpu7x:2x2x1
jax: 0.10.0
libtpu: 0.0.40
codegen_flags: <defaults>
</compile_context>

<pallas_src>
import functools

import jax
import jax.numpy as jnp
import numpy as np
from jax.experimental import pallas as pl
from jax.experimental.pallas import tpu as pltpu


# ----------------------------- Pallas kernel ------------------------------ #

def _qkv_rope_kernel(q_ref, k_ref, cs_ref, v_hbm,
                     qo_ref, ko_ref, vo_hbm, v_sem,
                     *, groups, hk_blk, head_dim, s_tile):
    """One grid step: one batch, one S tile, one block of hk_blk kv heads.

    q_ref : (s_tile, hk_blk*groups*head_dim)  pipelined VMEM block
    k_ref : (s_tile, hk_blk*head_dim)         pipelined VMEM block
    cs_ref: (s_tile, 2*head_dim)              cos | sign-folded sin (on-dtype)
    v_hbm : (B, S, Hk*head_dim)               raw HBM ref (pl.ANY)
    qo_ref: (hk_blk*groups, s_tile, head_dim) pipelined VMEM block
    ko_ref: (hk_blk, s_tile, head_dim)        pipelined VMEM block
    vo_hbm: (B, Hk, S, head_dim)              raw HBM ref (pl.ANY)
    v_sem : DMA semaphores, shape (hk_blk,)
    """
    D = head_dim
    half = D // 2

    b = pl.program_id(0)
    s_idx = pl.program_id(1)
    h_idx = pl.program_id(2)
    s0 = pl.multiple_of(s_idx * s_tile, s_tile)

    # ---- V: pure layout permutation. Direct HBM->HBM DMA (no VMEM staging,
    # no VPU), overlapped with the q/k RoPE compute below. ----
    v_copies = []
    for j in range(hk_blk):                      # static, unrolled
        h = h_idx * hk_blk + j
        lane0 = pl.multiple_of(h * D, D)
        cp = pltpu.make_async_copy(
            v_hbm.at[b, pl.ds(s0, s_tile), pl.ds(lane0, D)],
            vo_hbm.at[b, h, pl.ds(s0, s_tile), :],
            v_sem.at[j])
        cp.start()
        v_copies.append(cp)

    # cos / sin (sign already folded into sin), upcast once per step.
    cos = cs_ref[:, :D].astype(jnp.float32)          # (s_tile, D) f32
    sin = cs_ref[:, D:].astype(jnp.float32)          # (s_tile, D) f32

    def rope(xf):                                    # xf: (s_tile, D) f32
        return xf * cos + pltpu.roll(xf, shift=half, axis=1) * sin

    # K: hk_blk heads, per-head static ref slice + cast (no full-tile f32).
    for j in range(hk_blk):
        kf = k_ref[:, j * D:(j + 1) * D].astype(jnp.float32)
        ko_ref[j, :, :] = rope(kf).astype(ko_ref.dtype)

    # Q: hk_blk*groups heads packed on the lane axis; 128-lane-aligned slices.
    for g in range(hk_blk * groups):
        qf = q_ref[:, g * D:(g + 1) * D].astype(jnp.float32)
        qo_ref[g, :, :] = rope(qf).astype(qo_ref.dtype)

    # Ensure all v DMAs finished before this grid step retires.
    for cp in v_copies:
        cp.wait()


# ------------------------------ Module glue ------------------------------- #

def pseudo_llama_qkv_supply_forward(q, k, v, cos, sin, *,
                                    num_attention_heads, num_key_value_heads,
                                    head_dim, s_tile=512, hk_blk=None,
                                    vmem_budget_bytes=40 * (1 << 20)):
    """Equivalent of PseudoLlamaQKVSupply.forward (post-rope, no quant/calib,
    past_key_value=None).

    q:   (B, S, num_attention_heads * head_dim)
    k,v: (B, S, num_key_value_heads * head_dim)
    cos/sin: (S, head_dim) or (B, S, head_dim); assumed position-aligned to
             rows 0..S-1 (the reference module gathers by position_ids).
    returns q: (B, Hq, S, D), k: (B, Hk, S, D), v: (B, Hk, S, D)
    """
    B, S, _ = q.shape
    Hq, Hk, D = num_attention_heads, num_key_value_heads, head_dim
    groups = Hq // Hk
    assert Hq == Hk * groups
    assert q.shape[-1] == Hq * D and k.shape[-1] == Hk * D and v.shape[-1] == Hk * D

    # kv-head blocking factor: fatter contiguous k/v chunks, fewer grid steps.
    if hk_blk is None:
        hk_blk = 1
        for cand in (4, 2):
            if Hk % cand == 0 and cand * groups <= 16:
                hk_blk = cand
                break
    assert Hk % hk_blk == 0

    # cos / sign-folded sin -> one packed (S, 2*D) array in the activation
    # dtype (halves cos/sin HBM bytes vs f32, one DMA stream per step).
    if cos.ndim == 3:
        cos = cos[0]
    if sin.ndim == 3:
        sin = sin[0]
    sin32 = sin.astype(jnp.float32)
    sin_signed = jnp.concatenate([-sin32[:, :D // 2], sin32[:, D // 2:]], axis=-1)
    cs = jnp.concatenate([cos.astype(jnp.float32), sin_signed],
                         axis=-1).astype(q.dtype)                  # (S, 2D)

    # S tiling: blocks must have 8-divisible second-last dims (or full S) and
    # the manual v DMA requires s_tile | S.
    s_tile = min(s_tile, S)
    if S % s_tile != 0 or (s_tile % 8 != 0 and s_tile != S):
        s_tile = S  # TODO(synk): pick a divisor of S for ragged sequence lengths.

    in_isz = jnp.dtype(q.dtype).itemsize
    cs_isz = jnp.dtype(cs.dtype).itemsize

    def _vmem_estimate(st):
        blk = (st * hk_blk * groups * D * in_isz        # q in
               + st * hk_blk * D * in_isz               # k in
               + st * 2 * D * cs_isz                    # cos/sin
               + hk_blk * groups * st * D * in_isz      # q out
               + hk_blk * st * D * in_isz)              # k out
        return 2 * blk + 8 * st * D * 4                 # double-buffer + f32 temps

    # Shrink s_tile until the double-buffered working set fits the budget
    # (keeps v7x's 64 MiB physical VMEM safe).
    while (_vmem_estimate(s_tile) > vmem_budget_bytes
           and s_tile % 16 == 0 and S % (s_tile // 2) == 0):
        s_tile //= 2
    n_s = pl.cdiv(S, s_tile)

    # Explicit scoped-VMEM limit (v5e's 16 MiB default would not hold large
    # groups/s_tile configs); capped well under v7x's 64 MiB physical.
    vmem_limit = int(min(48 * (1 << 20),
                         max(_vmem_estimate(s_tile) + 4 * (1 << 20),
                             16 * (1 << 20))))

    kernel = functools.partial(_qkv_rope_kernel, groups=groups, hk_blk=hk_blk,
                               head_dim=D, s_tile=s_tile)

    q_out, k_out, v_out = pl.pallas_call(
        kernel,
        grid=(B, n_s, Hk // hk_blk),
        in_specs=[
            # q: (B, S, Hq*D); one block = S tile x hk_blk*groups heads of lanes.
            pl.BlockSpec((None, s_tile, hk_blk * groups * D),
                         lambda b, s, h: (b, s, h)),
            # k: (B, S, Hk*D); one block = S tile x hk_blk heads of lanes.
            pl.BlockSpec((None, s_tile, hk_blk * D), lambda b, s, h: (b, s, h)),
            # packed cos|sin_signed: (S, 2D); resident across the inner head axis.
            pl.BlockSpec((s_tile, 2 * D), lambda b, s, h: (s, 0)),
            # v stays in HBM; moved by manual DMA inside the kernel.
            pl.BlockSpec(memory_space=pl.ANY),
        ],
        out_specs=(
            # q_out: (B, Hq, S, D); one block = hk_blk*groups heads.
            pl.BlockSpec((None, hk_blk * groups, s_tile, D),
                         lambda b, s, h: (b, h, s, 0)),
            # k_out: (B, Hk, S, D); one block = hk_blk heads.
            pl.BlockSpec((None, hk_blk, s_tile, D), lambda b, s, h: (b, h, s, 0)),
            # v_out written directly in HBM by the manual DMAs.
            pl.BlockSpec(memory_space=pl.ANY),
        ),
        out_shape=(
            jax.ShapeDtypeStruct((B, Hq, S, D), q.dtype),
            jax.ShapeDtypeStruct((B, Hk, S, D), k.dtype),
            jax.ShapeDtypeStruct((B, Hk, S, D), v.dtype),
        ),
        scratch_shapes=[pltpu.SemaphoreType.DMA((hk_blk,))],
        compiler_params=pltpu.CompilerParams(
            dimension_semantics=("parallel", "parallel", "parallel"),
            vmem_limit_bytes=vmem_limit),
    )(q, k, cs, v)
    return q_out, k_out, v_out


# --------------------------- Pure-JAX reference ---------------------------- #

def _rope_ref(x, cos, sin):
    # x: (B, H, S, D); cos/sin: (S, D) in the activation dtype
    xf = x.astype(jnp.float32)
    c = cos.astype(jnp.float32)[None, None, :, :]
    s = sin.astype(jnp.float32)[None, None, :, :]
    d = x.shape[-1]
    rot = jnp.concatenate([-xf[..., d // 2:], xf[..., :d // 2]], axis=-1)
    return (xf * c + rot * s).astype(x.dtype)


# ---------------------------------- Main ----------------------------------- #

if __name__ == "__main__":
    # Small llama-ish config (head_dim = 128, the real Llama head size,
    # keeps the lane axis dense).
    batch = 2
    seq = 8
    num_attention_heads = 4
    num_key_value_heads = 2
    head_dim = 128
    hidden_size = num_attention_heads * head_dim            # 512
    kv_hidden = num_key_value_heads * head_dim              # 256
    on_dtype = jnp.bfloat16

    key = jax.random.PRNGKey(0)
    kq, kk, kv_ = jax.random.split(key, 3)
    q = jax.random.normal(kq, (batch, seq, hidden_size), dtype=on_dtype)
    k = jax.random.normal(kk, (batch, seq, kv_hidden), dtype=on_dtype)
    v = jax.random.normal(kv_, (batch, seq, kv_hidden), dtype=on_dtype)

    # Deterministic rotary embeddings (standard llama inv_freq schedule).
    inv_freq = 1.0 / (10000.0 ** (jnp.arange(0, head_dim, 2, dtype=jnp.float32)
                                  / head_dim))                       # (D/2,)
    positions = jnp.arange(seq, dtype=jnp.float32)                   # (S,)
    freqs = positions[:, None] * inv_freq[None, :]                   # (S, D/2)
    emb = jnp.concatenate([freqs, freqs], axis=-1)                   # (S, D)
    cos = jnp.cos(emb)                                               # (S, D) f32
    sin = jnp.sin(emb)                                               # (S, D) f32

    q_out, k_out, v_out = pseudo_llama_qkv_supply_forward(
        q, k, v, cos, sin,
        num_attention_heads=num_attention_heads,
        num_key_value_heads=num_key_value_heads,
        head_dim=head_dim)
    jax.block_until_ready((q_out, k_out, v_out))

    # Reference check (uses the same on-dtype cos/sin the kernel consumes).
    cos_od = cos.astype(on_dtype)
    sin_od = sin.astype(on_dtype)
    q_ref = _rope_ref(q.reshape(batch, seq, num_attention_heads, head_dim)
                       .transpose(0, 2, 1, 3), cos_od, sin_od)
    k_ref = _rope_ref(k.reshape(batch, seq, num_key_value_heads, head_dim)
                       .transpose(0, 2, 1, 3), cos_od, sin_od)
    v_ref = v.reshape(batch, seq, num_key_value_heads, head_dim).transpose(0, 2, 1, 3)

    np.testing.assert_allclose(np.asarray(q_out, dtype=np.float32),
                               np.asarray(q_ref, dtype=np.float32),
                               rtol=2e-2, atol=2e-2)
    np.testing.assert_allclose(np.asarray(k_out, dtype=np.float32),
                               np.asarray(k_ref, dtype=np.float32),
                               rtol=2e-2, atol=2e-2)
    np.testing.assert_allclose(np.asarray(v_out, dtype=np.float32),
                               np.asarray(v_ref, dtype=np.float32),
                               rtol=0, atol=0)

    print("KERNEL_OK")
</pallas_src>

<mosaic_0001>
module attributes {stable_mosaic.version = 11 : i64} {
  func.func @_qkv_rope_kernel(%arg0: i32, %arg1: i32, %arg2: i32, %arg3: memref<1x8x512xbf16, #tpu.memory_space<vmem>>, %arg4: memref<1x8x256xbf16, #tpu.memory_space<vmem>>, %arg5: memref<8x256xbf16, #tpu.memory_space<vmem>>, %arg6: memref<2x8x256xbf16, #tpu.memory_space<any>>, %arg7: memref<1x4x8x128xbf16, #tpu.memory_space<vmem>>, %arg8: memref<1x2x8x128xbf16, #tpu.memory_space<vmem>>, %arg9: memref<2x2x8x128xbf16, #tpu.memory_space<any>>, %arg10: memref<2x!tpu.dma_semaphore, #tpu.memory_space<semaphore_mem>>) attributes {dimension_semantics = [#tpu.dimension_semantics<parallel>, #tpu.dimension_semantics<parallel>, #tpu.dimension_semantics<parallel>], iteration_bounds = array<i64: 2, 1, 1>, scalar_prefetch = 0 : i64, scratch_operands = 1 : i64, tpu.core_type = #tpu.core_type<tc>, window_params = [{transform_indices = @transform_0, window_bounds = array<i64: 1, 8, 512>}, {transform_indices = @transform_1, window_bounds = array<i64: 1, 8, 256>}, {transform_indices = @transform_2, window_bounds = array<i64: 8, 256>}, {}, {transform_indices = @transform_4, window_bounds = array<i64: 1, 4, 8, 128>}, {transform_indices = @transform_5, window_bounds = array<i64: 1, 2, 8, 128>}, {}]} {
    %c8_i32 = arith.constant 8 : i32
    %0 = arith.muli %arg1, %c8_i32 : i32
    %1 = tpu.assume_multiple %0, 8 : i32
    %c2_i32 = arith.constant 2 : i32
    %2 = arith.muli %arg2, %c2_i32 : i32
    %c0_i32 = arith.constant 0 : i32
    %3 = arith.addi %2, %c0_i32 : i32
    %c128_i32 = arith.constant 128 : i32
    %4 = arith.muli %3, %c128_i32 : i32
    %5 = tpu.assume_multiple %4, 128 : i32
    %c0_i32_0 = arith.constant 0 : i32
    %6 = tpu.memref_slice %arg6[%arg0, %1, %5] : memref<2x8x256xbf16, #tpu.memory_space<any>> -> memref<1x8x128xbf16, #tpu.memory_space<any>>
    %7 = tpu.memref_squeeze %6 : memref<1x8x128xbf16, #tpu.memory_space<any>> -> memref<8x128xbf16, #tpu.memory_space<any>>
    %c0_i32_1 = arith.constant 0 : i32
    %8 = tpu.memref_slice %arg9[%arg0, %3, %1, %c0_i32_1] : memref<2x2x8x128xbf16, #tpu.memory_space<any>> -> memref<1x1x8x128xbf16, #tpu.memory_space<any>>
    %9 = tpu.memref_squeeze %8 : memref<1x1x8x128xbf16, #tpu.memory_space<any>> -> memref<8x128xbf16, #tpu.memory_space<any>>
    %10 = tpu.memref_slice %arg10[%c0_i32_0] : memref<2x!tpu.dma_semaphore, #tpu.memory_space<semaphore_mem>> -> memref<1x!tpu.dma_semaphore, #tpu.memory_space<semaphore_mem>>
    %11 = tpu.memref_squeeze %10 : memref<1x!tpu.dma_semaphore, #tpu.memory_space<semaphore_mem>> -> memref<!tpu.dma_semaphore, #tpu.memory_space<semaphore_mem>>
    tpu.enqueue_dma source(%7 : memref<8x128xbf16, #tpu.memory_space<any>>) target(%9 : memref<8x128xbf16, #tpu.memory_space<any>>) target_semaphore(%11 : memref<!tpu.dma_semaphore, #tpu.memory_space<semaphore_mem>>)
    %c2_i32_2 = arith.constant 2 : i32
    %12 = arith.muli %arg2, %c2_i32_2 : i32
    %c1_i32 = arith.constant 1 : i32
    %13 = arith.addi %12, %c1_i32 : i32
    %c128_i32_3 = arith.constant 128 : i32
    %14 = arith.muli %13, %c128_i32_3 : i32
    %15 = tpu.assume_multiple %14, 128 : i32
    %c1_i32_4 = arith.constant 1 : i32
    %16 = tpu.memref_slice %arg6[%arg0, %1, %15] : memref<2x8x256xbf16, #tpu.memory_space<any>> -> memref<1x8x128xbf16, #tpu.memory_space<any>>
    %17 = tpu.memref_squeeze %16 : memref<1x8x128xbf16, #tpu.memory_space<any>> -> memref<8x128xbf16, #tpu.memory_space<any>>
    %c0_i32_5 = arith.constant 0 : i32
    %18 = tpu.memref_slice %arg9[%arg0, %13, %1, %c0_i32_5] : memref<2x2x8x128xbf16, #tpu.memory_space<any>> -> memref<1x1x8x128xbf16, #tpu.memory_space<any>>
    %19 = tpu.memref_squeeze %18 : memref<1x1x8x128xbf16, #tpu.memory_space<any>> -> memref<8x128xbf16, #tpu.memory_space<any>>
    %20 = tpu.memref_slice %arg10[%c1_i32_4] : memref<2x!tpu.dma_semaphore, #tpu.memory_space<semaphore_mem>> -> memref<1x!tpu.dma_semaphore, #tpu.memory_space<semaphore_mem>>
    %21 = tpu.memref_squeeze %20 : memref<1x!tpu.dma_semaphore, #tpu.memory_space<semaphore_mem>> -> memref<!tpu.dma_semaphore, #tpu.memory_space<semaphore_mem>>
    tpu.enqueue_dma source(%17 : memref<8x128xbf16, #tpu.memory_space<any>>) target(%19 : memref<8x128xbf16, #tpu.memory_space<any>>) target_semaphore(%21 : memref<!tpu.dma_semaphore, #tpu.memory_space<semaphore_mem>>)
    %c0 = arith.constant 0 : index
    %c0_6 = arith.constant 0 : index
    %22 = vector.load %arg5[%c0, %c0_6] : memref<8x256xbf16, #tpu.memory_space<vmem>>, vector<8x128xbf16>
    %23 = arith.extf %22 : vector<8x128xbf16> to vector<8x128xf32>
    %c0_7 = arith.constant 0 : index
    %c128 = arith.constant 128 : index
    %24 = vector.load %arg5[%c0_7, %c128] : memref<8x256xbf16, #tpu.memory_space<vmem>>, vector<8x128xbf16>
    %25 = arith.extf %24 : vector<8x128xbf16> to vector<8x128xf32>
    %c0_8 = arith.constant 0 : index
    %c0_9 = arith.constant 0 : index
    %c0_10 = arith.constant 0 : index
    %26 = vector.load %arg4[%c0_8, %c0_9, %c0_10] : memref<1x8x256xbf16, #tpu.memory_space<vmem>>, vector<1x8x128xbf16>
    %27 = vector.shape_cast %26 : vector<1x8x128xbf16> to vector<8x128xbf16>
    %28 = arith.extf %27 : vector<8x128xbf16> to vector<8x128xf32>
    %29 = arith.mulf %28, %23 : vector<8x128xf32>
    %c64_i32 = arith.constant 64 : i32
    %30 = tpu.dynamic_rotate %28 by %c64_i32 dim 1 : vector<8x128xf32>, i32 -> vector<8x128xf32>
    %31 = arith.mulf %30, %25 : vector<8x128xf32>
    %32 = arith.addf %29, %31 : vector<8x128xf32>
    %33 = arith.truncf %32 : vector<8x128xf32> to vector<8x128xbf16>
    %c0_11 = arith.constant 0 : index
    %c0_12 = arith.constant 0 : index
    %c0_13 = arith.constant 0 : index
    %c0_14 = arith.constant 0 : index
    %34 = vector.load %arg8[%c0_11, %c0_12, %c0_13, %c0_14] : memref<1x2x8x128xbf16, #tpu.memory_space<vmem>>, vector<1x1x8x128xbf16>
    %35 = vector.shape_cast %34 : vector<1x1x8x128xbf16> to vector<8x128xbf16>
    %36 = vector.shape_cast %33 : vector<8x128xbf16> to vector<1x1x8x128xbf16>
    tpu.vector_store %arg8[%c0_11, %c0_12, %c0_13, %c0_14], %36 {strides = array<i32>} : memref<1x2x8x128xbf16, #tpu.memory_space<vmem>>, vector<1x1x8x128xbf16>,
    %c0_15 = arith.constant 0 : index
    %c0_16 = arith.constant 0 : index
    %c128_17 = arith.constant 128 : index
    %37 = vector.load %arg4[%c0_15, %c0_16, %c128_17] : memref<1x8x256xbf16, #tpu.memory_space<vmem>>, vector<1x8x128xbf16>
    %38 = vector.shape_cast %37 : vector<1x8x128xbf16> to vector<8x128xbf16>
    %39 = arith.extf %38 : vector<8x128xbf16> to vector<8x128xf32>
    %40 = arith.mulf %39, %23 : vector<8x128xf32>
    %c64_i32_18 = arith.constant 64 : i32
    %41 = tpu.dynamic_rotate %39 by %c64_i32_18 dim 1 : vector<8x128xf32>, i32 -> vector<8x128xf32>
    %42 = arith.mulf %41, %25 : vector<8x128xf32>
    %43 = arith.addf %40, %42 : vector<8x128xf32>
    %44 = arith.truncf %43 : vector<8x128xf32> to vector<8x128xbf16>
    %c0_19 = arith.constant 0 : index
    %c1 = arith.constant 1 : index
    %c0_20 = arith.constant 0 : index
    %c0_21 = arith.constant 0 : index
    %45 = vector.load %arg8[%c0_19, %c1, %c0_20, %c0_21] : memref<1x2x8x128xbf16, #tpu.memory_space<vmem>>, vector<1x1x8x128xbf16>
    %46 = vector.shape_cast %45 : vector<1x1x8x128xbf16> to vector<8x128xbf16>
    %47 = vector.shape_cast %44 : vector<8x128xbf16> to vector<1x1x8x128xbf16>
    tpu.vector_store %arg8[%c0_19, %c1, %c0_20, %c0_21], %47 {strides = array<i32>} : memref<1x2x8x128xbf16, #tpu.memory_space<vmem>>, vector<1x1x8x128xbf16>,
    %c0_22 = arith.constant 0 : index
    %c0_23 = arith.constant 0 : index
    %c0_24 = arith.constant 0 : index
    %48 = vector.load %arg3[%c0_22, %c0_23, %c0_24] : memref<1x8x512xbf16, #tpu.memory_space<vmem>>, vector<1x8x128xbf16>
    %49 = vector.shape_cast %48 : vector<1x8x128xbf16> to vector<8x128xbf16>
    %50 = arith.extf %49 : vector<8x128xbf16> to vector<8x128xf32>
    %51 = arith.mulf %50, %23 : vector<8x128xf32>
    %c64_i32_25 = arith.constant 64 : i32
    %52 = tpu.dynamic_rotate %50 by %c64_i32_25 dim 1 : vector<8x128xf32>, i32 -> vector<8x128xf32>
    %53 = arith.mulf %52, %25 : vector<8x128xf32>
    %54 = arith.addf %51, %53 : vector<8x128xf32>
    %55 = arith.truncf %54 : vector<8x128xf32> to vector<8x128xbf16>
    %c0_26 = arith.constant 0 : index
    %c0_27 = arith.constant 0 : index
    %c0_28 = arith.constant 0 : index
    %c0_29 = arith.constant 0 : index
    %56 = vector.load %arg7[%c0_26, %c0_27, %c0_28, %c0_29] : memref<1x4x8x128xbf16, #tpu.memory_space<vmem>>, vector<1x1x8x128xbf16>
    %57 = vector.shape_cast %56 : vector<1x1x8x128xbf16> to vector<8x128xbf16>
    %58 = vector.shape_cast %55 : vector<8x128xbf16> to vector<1x1x8x128xbf16>
    tpu.vector_store %arg7[%c0_26, %c0_27, %c0_28, %c0_29], %58 {strides = array<i32>} : memref<1x4x8x128xbf16, #tpu.memory_space<vmem>>, vector<1x1x8x128xbf16>,
    %c0_30 = arith.constant 0 : index
    %c0_31 = arith.constant 0 : index
    %c128_32 = arith.constant 128 : index
    %59 = vector.load %arg3[%c0_30, %c0_31, %c128_32] : memref<1x8x512xbf16, #tpu.memory_space<vmem>>, vector<1x8x128xbf16>
    %60 = vector.shape_cast %59 : vector<1x8x128xbf16> to vector<8x128xbf16>
    %61 = arith.extf %60 : vector<8x128xbf16> to vector<8x128xf32>
    %62 = arith.mulf %61, %23 : vector<8x128xf32>
    %c64_i32_33 = arith.constant 64 : i32
    %63 = tpu.dynamic_rotate %61 by %c64_i32_33 dim 1 : vector<8x128xf32>, i32 -> vector<8x128xf32>
    %64 = arith.mulf %63, %25 : vector<8x128xf32>
    %65 = arith.addf %62, %64 : vector<8x128xf32>
    %66 = arith.truncf %65 : vector<8x128xf32> to vector<8x128xbf16>
    %c0_34 = arith.constant 0 : index
    %c1_35 = arith.constant 1 : index
    %c0_36 = arith.constant 0 : index
    %c0_37 = arith.constant 0 : index
    %67 = vector.load %arg7[%c0_34, %c1_35, %c0_36, %c0_37] : memref<1x4x8x128xbf16, #tpu.memory_space<vmem>>, vector<1x1x8x128xbf16>
    %68 = vector.shape_cast %67 : vector<1x1x8x128xbf16> to vector<8x128xbf16>
    %69 = vector.shape_cast %66 : vector<8x128xbf16> to vector<1x1x8x128xbf16>
    tpu.vector_store %arg7[%c0_34, %c1_35, %c0_36, %c0_37], %69 {strides = array<i32>} : memref<1x4x8x128xbf16, #tpu.memory_space<vmem>>, vector<1x1x8x128xbf16>,
    %c0_38 = arith.constant 0 : index
    %c0_39 = arith.constant 0 : index
    %c256 = arith.constant 256 : index
    %70 = vector.load %arg3[%c0_38, %c0_39, %c256] : memref<1x8x512xbf16, #tpu.memory_space<vmem>>, vector<1x8x128xbf16>
    %71 = vector.shape_cast %70 : vector<1x8x128xbf16> to vector<8x128xbf16>
    %72 = arith.extf %71 : vector<8x128xbf16> to vector<8x128xf32>
    %73 = arith.mulf %72, %23 : vector<8x128xf32>
    %c64_i32_40 = arith.constant 64 : i32
    %74 = tpu.dynamic_rotate %72 by %c64_i32_40 dim 1 : vector<8x128xf32>, i32 -> vector<8x128xf32>
    %75 = arith.mulf %74, %25 : vector<8x128xf32>
    %76 = arith.addf %73, %75 : vector<8x128xf32>
    %77 = arith.truncf %76 : vector<8x128xf32> to vector<8x128xbf16>
    %c0_41 = arith.constant 0 : index
    %c2 = arith.constant 2 : index
    %c0_42 = arith.constant 0 : index
    %c0_43 = arith.constant 0 : index
    %78 = vector.load %arg7[%c0_41, %c2, %c0_42, %c0_43] : memref<1x4x8x128xbf16, #tpu.memory_space<vmem>>, vector<1x1x8x128xbf16>
    %79 = vector.shape_cast %78 : vector<1x1x8x128xbf16> to vector<8x128xbf16>
    %80 = vector.shape_cast %77 : vector<8x128xbf16> to vector<1x1x8x128xbf16>
    tpu.vector_store %arg7[%c0_41, %c2, %c0_42, %c0_43], %80 {strides = array<i32>} : memref<1x4x8x128xbf16, #tpu.memory_space<vmem>>, vector<1x1x8x128xbf16>,
    %c0_44 = arith.constant 0 : index
    %c0_45 = arith.constant 0 : index
    %c384 = arith.constant 384 : index
    %81 = vector.load %arg3[%c0_44, %c0_45, %c384] : memref<1x8x512xbf16, #tpu.memory_space<vmem>>, vector<1x8x128xbf16>
    %82 = vector.shape_cast %81 : vector<1x8x128xbf16> to vector<8x128xbf16>
    %83 = arith.extf %82 : vector<8x128xbf16> to vector<8x128xf32>
    %84 = arith.mulf %83, %23 : vector<8x128xf32>
    %c64_i32_46 = arith.constant 64 : i32
    %85 = tpu.dynamic_rotate %83 by %c64_i32_46 dim 1 : vector<8x128xf32>, i32 -> vector<8x128xf32>
    %86 = arith.mulf %85, %25 : vector<8x128xf32>
    %87 = arith.addf %84, %86 : vector<8x128xf32>
    %88 = arith.truncf %87 : vector<8x128xf32> to vector<8x128xbf16>
    %c0_47 = arith.constant 0 : index
    %c3 = arith.constant 3 : index
    %c0_48 = arith.constant 0 : index
    %c0_49 = arith.constant 0 : index
    %89 = vector.load %arg7[%c0_47, %c3, %c0_48, %c0_49] : memref<1x4x8x128xbf16, #tpu.memory_space<vmem>>, vector<1x1x8x128xbf16>
    %90 = vector.shape_cast %89 : vector<1x1x8x128xbf16> to vector<8x128xbf16>
    %91 = vector.shape_cast %88 : vector<8x128xbf16> to vector<1x1x8x128xbf16>
    tpu.vector_store %arg7[%c0_47, %c3, %c0_48, %c0_49], %91 {strides = array<i32>} : memref<1x4x8x128xbf16, #tpu.memory_space<vmem>>, vector<1x1x8x128xbf16>,
    %c0_i32_50 = arith.constant 0 : i32
    %92 = tpu.memref_slice %arg6[%arg0, %1, %5] : memref<2x8x256xbf16, #tpu.memory_space<any>> -> memref<1x8x128xbf16, #tpu.memory_space<any>>
    %93 = tpu.memref_squeeze %92 : memref<1x8x128xbf16, #tpu.memory_space<any>> -> memref<8x128xbf16, #tpu.memory_space<any>>
    %c0_i32_51 = arith.constant 0 : i32
    %94 = tpu.memref_slice %arg9[%arg0, %3, %1, %c0_i32_51] : memref<2x2x8x128xbf16, #tpu.memory_space<any>> -> memref<1x1x8x128xbf16, #tpu.memory_space<any>>
    %95 = tpu.memref_squeeze %94 : memref<1x1x8x128xbf16, #tpu.memory_space<any>> -> memref<8x128xbf16, #tpu.memory_space<any>>
    %96 = tpu.memref_slice %arg10[%c0_i32_50] : memref<2x!tpu.dma_semaphore, #tpu.memory_space<semaphore_mem>> -> memref<1x!tpu.dma_semaphore, #tpu.memory_space<semaphore_mem>>
    %97 = tpu.memref_squeeze %96 : memref<1x!tpu.dma_semaphore, #tpu.memory_space<semaphore_mem>> -> memref<!tpu.dma_semaphore, #tpu.memory_space<semaphore_mem>>
    tpu.wait_dma2 semaphore(%97 : memref<!tpu.dma_semaphore, #tpu.memory_space<semaphore_mem>>) src(%93 : memref<8x128xbf16, #tpu.memory_space<any>>) dst(%95 : memref<8x128xbf16, #tpu.memory_space<any>>)
    %c1_i32_52 = arith.constant 1 : i32
    %98 = tpu.memref_slice %arg6[%arg0, %1, %15] : memref<2x8x256xbf16, #tpu.memory_space<any>> -> memref<1x8x128xbf16, #tpu.memory_space<any>>
    %99 = tpu.memref_squeeze %98 : memref<1x8x128xbf16, #tpu.memory_space<any>> -> memref<8x128xbf16, #tpu.memory_space<any>>
    %c0_i32_53 = arith.constant 0 : i32
    %100 = tpu.memref_slice %arg9[%arg0, %13, %1, %c0_i32_53] : memref<2x2x8x128xbf16, #tpu.memory_space<any>> -> memref<1x1x8x128xbf16, #tpu.memory_space<any>>
    %101 = tpu.memref_squeeze %100 : memref<1x1x8x128xbf16, #tpu.memory_space<any>> -> memref<8x128xbf16, #tpu.memory_space<any>>
    %102 = tpu.memref_slice %arg10[%c1_i32_52] : memref<2x!tpu.dma_semaphore, #tpu.memory_space<semaphore_mem>> -> memref<1x!tpu.dma_semaphore, #tpu.memory_space<semaphore_mem>>
    %103 = tpu.memref_squeeze %102 : memref<1x!tpu.dma_semaphore, #tpu.memory_space<semaphore_mem>> -> memref<!tpu.dma_semaphore, #tpu.memory_space<semaphore_mem>>
    tpu.wait_dma2 semaphore(%103 : memref<!tpu.dma_semaphore, #tpu.memory_space<semaphore_mem>>) src(%99 : memref<8x128xbf16, #tpu.memory_space<any>>) dst(%101 : memref<8x128xbf16, #tpu.memory_space<any>>)
    return
  }
  func.func @transform_0(%arg0: i32, %arg1: i32, %arg2: i32) -> (i32, i32, i32) {
    %c0_i32 = arith.constant 0 : i32
    return %arg0, %arg1, %arg2 : i32, i32, i32
  }
  func.func @transform_1(%arg0: i32, %arg1: i32, %arg2: i32) -> (i32, i32, i32) {
    %c0_i32 = arith.constant 0 : i32
    return %arg0, %arg1, %arg2 : i32, i32, i32
  }
  func.func @transform_2(%arg0: i32, %arg1: i32, %arg2: i32) -> (i32, i32) {
    %c0_i32 = arith.constant 0 : i32
    %c0_i32_0 = arith.constant 0 : i32
    return %arg1, %c0_i32 : i32, i32
  }
  func.func @transform_4(%arg0: i32, %arg1: i32, %arg2: i32) -> (i32, i32, i32, i32) {
    %c0_i32 = arith.constant 0 : i32
    %c0_i32_0 = arith.constant 0 : i32
    return %arg0, %arg2, %arg1, %c0_i32 : i32, i32, i32, i32
  }
  func.func @transform_5(%arg0: i32, %arg1: i32, %arg2: i32) -> (i32, i32, i32, i32) {
    %c0_i32 = arith.constant 0 : i32
    %c0_i32_0 = arith.constant 0 : i32
    return %arg0, %arg2, %arg1, %c0_i32 : i32, i32, i32, i32
  }
}

</mosaic_0001>

<llo_original>
// kernel: tpu_custom_call.1
$region0: #{tpu_custom_call.1}
  #allocation0 [shape = 'u32[]', space=smem, size = 0x4, offset = 0x4, fixed_abs, tag = 'smem constant byte address 0x4 - core index']
  #allocation1 [shape = 'u32[144,128]{1,0:T(1,128)}', space=vmem, size = 0x12000, scoped, tag = 'internal scratch']
  #allocation2 [shape = 's32[2]{0}', space=sflag, size = 0x8, scoped, tag = 'scratch operand']
  #allocation12 [shape = 's32[]', space=sflag, size = 0x4, offset = 0, fixed_abs, tag = 'sflag constant byte address 0x0 - dummy sync flag']
  #allocation13 [shape = 'u32[0]{0}', space=smem, size = 0, offset = 0, fixed_abs, tag = 'smem constant byte address 0x0 - null']
  #allocation14 [shape = 's32[]', space=sflag, size = 0x4, offset = 0, fixed_abs, tag = 'sflag constant byte address 0x0 - dummy sync flag']
  #allocation15 [shape = 'u32[0]{0}', space=smem, size = 0, offset = 0, fixed_abs, tag = 'smem constant byte address 0x0 - null']
  %s0 = inlined_call_operand.hbm [shape: bf16[2,8,512], index: 0, kind: input, shape index: {}]
  %s1 = inlined_call_operand.hbm [shape: bf16[2,8,256], index: 1, kind: input, shape index: {}]
  %s2 = inlined_call_operand.hbm [shape: bf16[8,256], index: 2, kind: input, shape index: {}]
  %s3 = inlined_call_operand.hbm [shape: bf16[2,8,256], index: 3, kind: input, shape index: {}]
  %s4 = inlined_call_operand.hbm [shape: bf16[2,4,8,128], index: 4, kind: output, shape index: {0}]
  %s5 = inlined_call_operand.hbm [shape: bf16[2,2,8,128], index: 5, kind: output, shape index: {1}]
  %s6 = inlined_call_operand.hbm [shape: bf16[2,2,8,128], index: 6, kind: output, shape index: {2}]
  %7 = xla_tuple %s4, %s5, %s6
  %s8 = sld [smem:[#allocation0]]
  $region65: #{tpu_custom_call.1} parent=0
    _
  %s10 = ssub.s32 1, %s8
  %s11 = scalar_select 0, %s10, %s8
  $region1: #{tpu_custom_call.1} parent=0
    #allocation3 [shape = 'u8[16384]{0}', space=vmem, size = 0x4000, scoped, tag = 'input window, operand 0']
    #allocation4 [shape = 's32[2]{0}', space=sflag, size = 0x8, scoped, tag = 'scoped memory for tpu_custom_call.1']
    #allocation5 [shape = 's32[2]{0}', space=sflag, size = 0x8, scoped, tag = 'scoped memory for tpu_custom_call.1']
    #allocation6 [shape = 'u8[8192]{0}', space=vmem, size = 0x2000, scoped, tag = 'input window, operand 1']
    #allocation7 [shape = 's32[2]{0}', space=sflag, size = 0x8, scoped, tag = 'scoped memory for tpu_custom_call.1']
    #allocation8 [shape = 'u8[4096]{0}', space=vmem, size = 0x1000, scoped, tag = 'input window, operand 2, single buffered']
    #allocation9 [shape = 'u8[16384]{0}', space=vmem, size = 0x4000, scoped, tag = 'output window, operand 0']
    #allocation10 [shape = 'u8[8192]{0}', space=vmem, size = 0x2000, scoped, tag = 'output window, operand 1']
    #allocation11 [shape = 's32[2]{0}', space=sflag, size = 0x8, scoped, tag = 'scoped memory for tpu_custom_call.1']
    %12 = vsyncpa [#allocation4], 0
    %s13 = scalar_lea.sflag [#allocation4], 1
    %14 = vsyncpa %s13, 0
    %15 = vsyncpa [#allocation7], 0
    %s16 = scalar_lea.sflag [#allocation7], 1
    %17 = vsyncpa %s16, 0
    %18 = vsyncpa [#allocation5], 0
    %s19 = scalar_lea.sflag [#allocation5], 1
    %20 = vsyncpa %s19, 0
    %21 = vsyncpa [#allocation11], 0
    %s22 = scalar_lea.sflag [#allocation11], 1
    %23 = vsyncpa %s22, 0
    loop: start=0, step=1, limit=4
    $region2: #{tpu_custom_call.1} parent=1 // loop_pre_header
      _
    $region3: #{tpu_custom_call.1} parent=1 // loop_header
      %s25 = sphi 0, %s29
      %p26 = scmp.ge.s32.totalorder %s25, 4
      %s32 = sphi 0, %s51
      %s33 = sphi 0, %s47
      %s34 = sphi 0, %s43
      %s35 = sphi 0, %s32
      %s36 = sphi 0, %s33
      %s37 = sphi 0, %s34
      %s38 = sphi 0, %s35
      %s39 = sphi 0, %s36
      %s40 = sphi 0, %s37
      %s58 = sphi 0, %s60
      %s61 = sphi 0, %s58
      %s62 = sphi 0, %s61
      %s78 = sphi 0, %s62
      %s88 = sphi 0, %s90
      %s91 = sphi 0, %s88
      %s92 = sphi 0, %s91
      %s108 = sphi 0, %s92
      %s114 = sphi 0, %s116
      %s117 = sphi 0, %s114
      %s118 = sphi 0, %s117
      %s134 = sphi 0, %s118
      %s144 = sphi 0, %s146
      %s147 = sphi 0, %s144
      %s148 = sphi 0, %s147
      %s164 = sphi 0, %s148
      %s174 = sphi 0, %s176
      %s177 = sphi 0, %s174
      %s178 = sphi 0, %s177
      %s194 = sphi 0, %s178
    $region4: #{tpu_custom_call.1} parent=1 // loop_header_branch
      %28 = sbr.rel (%p26) target = $region8
    $region5: #{tpu_custom_call.1} parent=1 // loop_body
      %s30 = ssub.s32 %s25, 1
      %s31 = ssub.s32 %s25, 2
      %s41 = sadd.s32 1, %s34
      %p42 = scmp.ge.s32.totalorder %s41, 1
      %s43 = scalar_select %p42, 0, %s41
      %s44 = sadd.s32 1, %s33
      %s45 = scalar_select %p42, %s44, %s33
      %p46 = scmp.ge.s32.totalorder %s45, 1
      %s47 = scalar_select %p46, 0, %s45
      %s48 = sadd.s32 1, %s32
      %s49 = scalar_select %p46, %s48, %s32
      %p50 = scmp.ge.s32.totalorder %s49, 2
      %s51 = scalar_select %p50, 0, %s49
      %s52 = ssub.s32 %s32, %s51
      %s53 = ssub.s32 %s33, %s47
      %s54 = sor.u32 %s52, %s53
      %s55 = ssub.s32 %s34, %s43
      %s56 = sor.u32 %s54, %s55
      %p57 = scmp.eq.s32.totalorder %s56, 0
      %s59 = sadd.s32 %s58, 1
      %s60 = scalar_select %p57, %s58, %s59
      %p63 = pneg %p57
      %p64 = scmp.eq.s32.totalorder %s25, 1
      %p65 = por %p63, %p64
      %p66 = scmp.ne.s32.totalorder %s58, %s61
      %p67 = scmp.eq.s32.totalorder %s25, 0
      %p68 = por %p66, %p67
      %p69 = scmp.ne.s32.totalorder %s58, %s61
      %p70 = scmp.eq.s32.totalorder %s30, 1
      %p71 = por %p69, %p70
      %p72 = scmp.ne.s32.totalorder %s61, %s62
      %p73 = scmp.eq.s32.totalorder %s30, 0
      %p74 = por %p72, %p73
      %p75 = scmp.ne.s32.totalorder %s61, %s62
      %p76 = scmp.eq.s32.totalorder %s31, 1
      %p77 = por %p75, %p76
      %p79 = scmp.ne.s32.totalorder %s62, %s78
      %p80 = scmp.eq.s32.totalorder %s31, 0
      %p81 = por %p79, %p80
      %s82 = ssub.s32 %s32, %s51
      %s83 = ssub.s32 %s33, %s47
      %s84 = sor.u32 %s82, %s83
      %s85 = ssub.s32 %s34, %s43
      %s86 = sor.u32 %s84, %s85
      %p87 = scmp.eq.s32.totalorder %s86, 0
      %s89 = sadd.s32 %s88, 1
      %s90 = scalar_select %p87, %s88, %s89
      %p93 = pneg %p87
      %p94 = scmp.eq.s32.totalorder %s25, 1
      %p95 = por %p93, %p94
      %p96 = scmp.ne.s32.totalorder %s88, %s91
      %p97 = scmp.eq.s32.totalorder %s25, 0
      %p98 = por %p96, %p97
      %p99 = scmp.ne.s32.totalorder %s88, %s91
      %p100 = scmp.eq.s32.totalorder %s30, 1
      %p101 = por %p99, %p100
      %p102 = scmp.ne.s32.totalorder %s91, %s92
      %p103 = scmp.eq.s32.totalorder %s30, 0
      %p104 = por %p102, %p103
      %p105 = scmp.ne.s32.totalorder %s91, %s92
      %p106 = scmp.eq.s32.totalorder %s31, 1
      %p107 = por %p105, %p106
      %p109 = scmp.ne.s32.totalorder %s92, %s108
      %p110 = scmp.eq.s32.totalorder %s31, 0
      %p111 = por %p109, %p110
      %s112 = ssub.s32 %s33, %s47
      %p113 = scmp.eq.s32.totalorder %s112, 0
      %s115 = sadd.s32 %s114, 1
      %s116 = scalar_select %p113, %s114, %s115
      %p119 = pneg %p113
      %p120 = scmp.eq.s32.totalorder %s25, 1
      %p121 = por %p119, %p120
      %p122 = scmp.ne.s32.totalorder %s114, %s117
      %p123 = scmp.eq.s32.totalorder %s25, 0
      %p124 = por %p122, %p123
      %p125 = scmp.ne.s32.totalorder %s114, %s117
      %p126 = scmp.eq.s32.totalorder %s30, 1
      %p127 = por %p125, %p126
      %p128 = scmp.ne.s32.totalorder %s117, %s118
      %p129 = scmp.eq.s32.totalorder %s30, 0
      %p130 = por %p128, %p129
      %p131 = scmp.ne.s32.totalorder %s117, %s118
      %p132 = scmp.eq.s32.totalorder %s31, 1
      %p133 = por %p131, %p132
      %p135 = scmp.ne.s32.totalorder %s118, %s134
      %p136 = scmp.eq.s32.totalorder %s31, 0
      %p137 = por %p135, %p136
      %s138 = ssub.s32 %s32, %s51
      %s139 = ssub.s32 %s34, %s43
      %s140 = sor.u32 %s138, %s139
      %s141 = ssub.s32 %s33, %s47
      %s142 = sor.u32 %s140, %s141
      %p143 = scmp.eq.s32.totalorder %s142, 0
      %s145 = sadd.s32 %s144, 1
      %s146 = scalar_select %p143, %s144, %s145
      %p149 = pneg %p143
      %p150 = scmp.eq.s32.totalorder %s25, 1
      %p151 = por %p149, %p150
      %p152 = scmp.ne.s32.totalorder %s144, %s147
      %p153 = scmp.eq.s32.totalorder %s25, 0
      %p154 = por %p152, %p153
      %p155 = scmp.ne.s32.totalorder %s144, %s147
      %p156 = scmp.eq.s32.totalorder %s30, 1
      %p157 = por %p155, %p156
      %p158 = scmp.ne.s32.totalorder %s147, %s148
      %p159 = scmp.eq.s32.totalorder %s30, 0
      %p160 = por %p158, %p159
      %p161 = scmp.ne.s32.totalorder %s147, %s148
      %p162 = scmp.eq.s32.totalorder %s31, 1
      %p163 = por %p161, %p162
      %p165 = scmp.ne.s32.totalorder %s148, %s164
      %p166 = scmp.eq.s32.totalorder %s31, 0
      %p167 = por %p165, %p166
      %s168 = ssub.s32 %s32, %s51
      %s169 = ssub.s32 %s34, %s43
      %s170 = sor.u32 %s168, %s169
      %s171 = ssub.s32 %s33, %s47
      %s172 = sor.u32 %s170, %s171
      %p173 = scmp.eq.s32.totalorder %s172, 0
      %s175 = sadd.s32 %s174, 1
      %s176 = scalar_select %p173, %s174, %s175
      %p179 = pneg %p173
      %p180 = scmp.eq.s32.totalorder %s25, 1
      %p181 = por %p179, %p180
      %p182 = scmp.ne.s32.totalorder %s174, %s177
      %p183 = scmp.eq.s32.totalorder %s25, 0
      %p184 = por %p182, %p183
      %p185 = scmp.ne.s32.totalorder %s174, %s177
      %p186 = scmp.eq.s32.totalorder %s30, 1
      %p187 = por %p185, %p186
      %p188 = scmp.ne.s32.totalorder %s177, %s178
      %p189 = scmp.eq.s32.totalorder %s30, 0
      %p190 = por %p188, %p189
      %p191 = scmp.ne.s32.totalorder %s177, %s178
      %p192 = scmp.eq.s32.totalorder %s31, 1
      %p193 = por %p191, %p192
      %p195 = scmp.ne.s32.totalorder %s178, %s194
      %p196 = scmp.eq.s32.totalorder %s31, 0
      %p197 = por %p195, %p196
      %p198 = scmp.le.s32.totalorder 1, %s25
      %p199 = scmp.lt.s32.totalorder %s25, 3
      %p200 = pnand %p198, %p199
      %p201 = pneg %p200
      // Predicated region
      $region9: #{tpu_custom_call.1} parent=5 // pred_check
        _
      $region10: #{tpu_custom_call.1} parent=5 // pred_check_branch
        %203 = sbr.rel (%p200) target = $region12
      $region11: #{tpu_custom_call.1} parent=5 // pred_region
        %s204 = ssub.s32 %s25, 1
        // Predicated region
        $region13: #{tpu_custom_call.1} parent=11 // pred_check
          %p205 = pneg %p130
        $region14: #{tpu_custom_call.1} parent=11 // pred_check_branch
          %207 = sbr.rel (%p205) target = $region16
        $region15: #{tpu_custom_call.1} parent=11 // pred_region
          %s209 = ssub.s32 128, 128
          %210 = vsyncadd [#allocation7], %s209
          %s211 = smul.addr %s36, 2
          %s212 = smul.addr %s211, 64
          %s213 = scalar_lea.hbm %s2, %s212
          %s215 = sshll.u32 [#allocation8], 4
          %s216 = int_to_ptr.vmem [resolvable:$true] %s215
          %218 = dma.hbm_to_vmem [thread:$0]  %s213, 128, %s216, [#allocation7]
        $region16: #{tpu_custom_call.1} parent=11 // pred_fallthru
          _
      $region12: #{tpu_custom_call.1} parent=5 // pred_fallthru
        _
      %p219 = scmp.lt.s32.totalorder %s25, 2
      // Predicated region
      $region17: #{tpu_custom_call.1} parent=5 // pred_check
        %p220 = pneg %p219
      $region18: #{tpu_custom_call.1} parent=5 // pred_check_branch
        %222 = sbr.rel (%p220) target = $region20
      $region19: #{tpu_custom_call.1} parent=5 // pred_region
        // Predicated region
        $region21: #{tpu_custom_call.1} parent=19 // pred_check
          %p223 = pneg %p68
        $region22: #{tpu_custom_call.1} parent=19 // pred_check_branch
          %225 = sbr.rel (%p223) target = $region24
        $region23: #{tpu_custom_call.1} parent=19 // pred_region
          %s226 = sand.u32 %s58, 1
          %s227 = scalar_lea.sflag [#allocation4], %s226
          %s228 = sand.u32 %s58, 1
          %s229 = smul.addr %s228, 16
          %s230 = scalar_lea.vmem [#allocation3], %s229
          %s231 = smul.u32 4, %s34
          %s233 = ssub.s32 256, 256
          %234 = vsyncadd %s227, %s233
          %s235 = smul.addr %s33, 4
          %s236 = sadd.s32 %s231, %s235
          %s237 = smul.addr %s32, 4
          %s238 = sadd.s32 %s236, %s237
          %s239 = smul.addr %s238, 64
          %s240 = scalar_lea.hbm %s0, %s239
          %s242 = sshll.u32 %s230, 4
          %s243 = int_to_ptr.vmem [resolvable:$true] %s242
          %245 = dma.hbm_to_vmem [thread:$0]  %s240, 256, %s243, %s227
        $region24: #{tpu_custom_call.1} parent=19 // pred_fallthru
          _
        // Predicated region
        $region25: #{tpu_custom_call.1} parent=19 // pred_check
          %p246 = pneg %p98
        $region26: #{tpu_custom_call.1} parent=19 // pred_check_branch
          %248 = sbr.rel (%p246) target = $region28
        $region27: #{tpu_custom_call.1} parent=19 // pred_region
          %s249 = sand.u32 %s25, 1
          %s250 = scalar_lea.sflag [#allocation7], %s249
          %s251 = sand.u32 %s88, 1
          %s252 = smul.addr %s251, 8
          %s253 = scalar_lea.vmem [#allocation6], %s252
          %s254 = smul.u32 2, %s34
          %s256 = ssub.s32 128, 128
          %257 = vsyncadd %s250, %s256
          %s258 = smul.addr %s33, 2
          %s259 = sadd.s32 %s254, %s258
          %s260 = smul.addr %s32, 2
          %s261 = sadd.s32 %s259, %s260
          %s262 = smul.addr %s261, 64
          %s263 = scalar_lea.hbm %s1, %s262
          %s265 = sshll.u32 %s253, 4
          %s266 = int_to_ptr.vmem [resolvable:$true] %s265
          %268 = dma.hbm_to_vmem [thread:$0]  %s263, 128, %s266, %s250
        $region28: #{tpu_custom_call.1} parent=19 // pred_fallthru
          _
      $region20: #{tpu_custom_call.1} parent=5 // pred_fallthru
        _
      %p269 = scmp.le.s32.totalorder 1, %s25
      %p270 = scmp.lt.s32.totalorder %s25, 3
      %p271 = pnand %p269, %p270
      %p272 = pneg %p271
      // Predicated region
      $region29: #{tpu_custom_call.1} parent=5 // pred_check
        _
      $region30: #{tpu_custom_call.1} parent=5 // pred_check_branch
        %274 = sbr.rel (%p271) target = $region32
      $region31: #{tpu_custom_call.1} parent=5 // pred_region
        %s275 = ssub.s32 %s25, 1
        %s276 = sand.u32 %s61, 1
        %s277 = scalar_lea.sflag [#allocation4], %s276
        %s278 = sand.u32 %s61, 1
        %s279 = smul.addr %s278, 16
        %s280 = scalar_lea.vmem [#allocation3], %s279
        // Predicated region
        $region33: #{tpu_custom_call.1} parent=31 // pred_check
          %p281 = pneg %p74
        $region34: #{tpu_custom_call.1} parent=31 // pred_check_branch
          %283 = sbr.rel (%p281) target = $region36
        $region35: #{tpu_custom_call.1} parent=31 // pred_region
          %284 = dma.done %s277, 256
        $region36: #{tpu_custom_call.1} parent=31 // pred_fallthru
          _
        %s285 = sand.u32 %s30, 1
        %s286 = scalar_lea.sflag [#allocation7], %s285
        %s287 = sand.u32 %s91, 1
        %s288 = smul.addr %s287, 8
        %s289 = scalar_lea.vmem [#allocation6], %s288
        // Predicated region
        $region37: #{tpu_custom_call.1} parent=31 // pred_check
          %p290 = pneg %p104
        $region38: #{tpu_custom_call.1} parent=31 // pred_check_branch
          %292 = sbr.rel (%p290) target = $region40
        $region39: #{tpu_custom_call.1} parent=31 // pred_region
          %293 = dma.done %s286, 128
        $region40: #{tpu_custom_call.1} parent=31 // pred_fallthru
          _
        // Predicated region
        $region41: #{tpu_custom_call.1} parent=31 // pred_check
          %p294 = pneg %p130
        $region42: #{tpu_custom_call.1} parent=31 // pred_check_branch
          %296 = sbr.rel (%p294) target = $region44
        $region43: #{tpu_custom_call.1} parent=31 // pred_region
          %297 = dma.done [#allocation7], 128
        $region44: #{tpu_custom_call.1} parent=31 // pred_fallthru
          _
        %s298 = sand.u32 %s61, 1
        %s299 = scalar_lea.sflag [#allocation4], %s298
        %s300 = sand.u32 %s61, 1
        %s301 = smul.addr %s300, 16
        %s302 = scalar_lea.vmem [#allocation3], %s301
        %p303 = pneg %p74
        %p304 = pneg %p71
        %s305 = sand.u32 %s30, 1
        %s306 = scalar_lea.sflag [#allocation7], %s305
        %s307 = sand.u32 %s91, 1
        %s308 = smul.addr %s307, 8
        %s309 = scalar_lea.vmem [#allocation6], %s308
        %p310 = pneg %p104
        %p311 = pneg %p101
        %p312 = pneg %p130
        %p313 = pneg %p127
        %p314 = pneg %p160
        %p315 = pneg %p157
        %s316 = sand.u32 %s147, 1
        %s317 = scalar_lea.sflag [#allocation5], %s316
        %s318 = sand.u32 %s147, 1
        %s319 = smul.addr %s318, 16
        %s320 = scalar_lea.vmem [#allocation9], %s319
        %p321 = pneg %p190
        %p322 = pneg %p187
        %s323 = sand.u32 %s177, 1
        %s324 = scalar_lea.sflag [#allocation11], %s323
        %s325 = sand.u32 %s177, 1
        %s326 = smul.addr %s325, 8
        %s327 = scalar_lea.vmem [#allocation10], %s326
        %s328 = smul.u32 4, %s37
        %s329 = smul.u32 2, %s37
        %s330 = smul.u32 4, %s37
        %s331 = smul.u32 2, %s37
        %s332 = smul.u32 %s36, 8
        %s333 = smul.u32 %s37, 2
        %s334 = smul.u32 %s37, 256
        %s335 = sshra.s32 %s334, 7
        %s336 = sand.u32 %s334, 127
        %s337 = sshra.s32 %s332, 3
        %s338 = sand.u32 %s332, 7
        %s339 = smul.u32 %s337, 2
        %s340 = sadd.s32 %s335, %s339
        %s341 = smul.u32 %s35, 2
        %s342 = sadd.s32 %s340, %s341
        %s343 = smul.addr %s342, 64
        %s344 = scalar_lea.hbm %s3, %s343
        %s345 = sadd.s32 %s337, %s333
        %s346 = sadd.s32 %s345, %s341
        %s347 = smul.addr %s346, 64
        %s348 = scalar_lea.hbm %s6, %s347
        %s350 = sshll.u32 1, 14
        %s351 = sxor.u32 4294967295, %s350
        %s354 = sshll.u32 3, 24
        %s355 = sxor.u32 4294967295, %s354
        %s356 = sand.u32 0, %s355
        %s358 = sor.u32 %s356, 0
        %361 = dma.general %s344, 64, %s348, [#allocation2], [#allocation12], [#allocation13], %s358, 0
        %s362 = sadd.s32 %s333, 1
        %s363 = smul.u32 %s362, 128
        %s364 = sshra.s32 %s363, 7
        %s365 = sand.u32 %s363, 127
        %s366 = sadd.s32 %s364, %s339
        %s367 = sadd.s32 %s366, %s341
        %s368 = smul.addr %s367, 64
        %s369 = scalar_lea.hbm %s3, %s368
        %s370 = sadd.s32 %s337, %s362
        %s371 = sadd.s32 %s370, %s341
        %s372 = smul.addr %s371, 64
        %s373 = scalar_lea.hbm %s6, %s372
        %s374 = scalar_lea.sflag [#allocation2], 1
        %s376 = sshll.u32 1, 14
        %s377 = sxor.u32 4294967295, %s376
        %s380 = sshll.u32 3, 24
        %s381 = sxor.u32 4294967295, %s380
        %s382 = sand.u32 0, %s381
        %s384 = sor.u32 %s382, 0
        %387 = dma.general %s369, 64, %s373, %s374, [#allocation14], [#allocation15], %s384, 0
        %v388 = vld [vmem:[#allocation8] sm:$0xf]
        %v389 = vunpack.c.l.bf16 %v388
        %v390 = vld [vmem:[#allocation8 + $0x4] sm:$0xf]
        %v391 = vunpack.c.l.bf16 %v390
        %v392 = vld [vmem:[%s289] sm:$0xf]
        %v393 = vunpack.c.l.bf16 %v392
        %v394 = vmul.f32 %v393, %v389
        %395 = vrot.lane.b32.xlu0 %v393, 64
        %v396 = vpop.permute.xlu0 %395
        %v397 = vmul.f32 %v396, %v391
        %v398 = vadd.f32 %v394, %v397
        %v399 = vpack.c.bf16 %v398, %v398
        %400 = vst [vmem:[%s327] sm:$0xf] %v399
        %v401 = vld [vmem:[%s289 + $0x4] sm:$0xf]
        %v402 = vunpack.c.l.bf16 %v401
        %v403 = vmul.f32 %v402, %v389
        %404 = vrot.lane.b32.xlu0 %v402, 64
        %v405 = vpop.permute.xlu0 %404
        %v406 = vmul.f32 %v405, %v391
        %v407 = vadd.f32 %v403, %v406
        %v408 = vpack.c.bf16 %v407, %v407
        %s409 = scalar_lea.vmem %s327, 4 [#allocation10]
        %410 = vst [vmem:[%s409] sm:$0xf] %v408
        %v411 = vld [vmem:[%s280] sm:$0xf]
        %v412 = vunpack.c.l.bf16 %v411
        %v413 = vmul.f32 %v412, %v389
        %414 = vrot.lane.b32.xlu0 %v412, 64
        %v415 = vpop.permute.xlu0 %414
        %v416 = vmul.f32 %v415, %v391
        %v417 = vadd.f32 %v413, %v416
        %v418 = vpack.c.bf16 %v417, %v417
        %419 = vst [vmem:[%s320] sm:$0xf] %v418
        %v420 = vld [vmem:[%s280 + $0x4] sm:$0xf]
        %v421 = vunpack.c.l.bf16 %v420
        %v422 = vmul.f32 %v421, %v389
        %423 = vrot.lane.b32.xlu0 %v421, 64
        %v424 = vpop.permute.xlu0 %423
        %v425 = vmul.f32 %v424, %v391
        %v426 = vadd.f32 %v422, %v425
        %v427 = vpack.c.bf16 %v426, %v426
        %s428 = scalar_lea.vmem %s320, 4 [#allocation9]
        %429 = vst [vmem:[%s428] sm:$0xf] %v427
        %v430 = vld [vmem:[%s280 + $0x8] sm:$0xf]
        %v431 = vunpack.c.l.bf16 %v430
        %v432 = vmul.f32 %v431, %v389
        %433 = vrot.lane.b32.xlu0 %v431, 64
        %v434 = vpop.permute.xlu0 %433
        %v435 = vmul.f32 %v434, %v391
        %v436 = vadd.f32 %v432, %v435
        %v437 = vpack.c.bf16 %v436, %v436
        %s438 = scalar_lea.vmem %s320, 8 [#allocation9]
        %439 = vst [vmem:[%s438] sm:$0xf] %v437
        %v440 = vld [vmem:[%s280 + $0xc] sm:$0xf]
        %v441 = vunpack.c.l.bf16 %v440
        %v442 = vmul.f32 %v441, %v389
        %443 = vrot.lane.b32.xlu0 %v441, 64
        %v444 = vpop.permute.xlu0 %443
        %v445 = vmul.f32 %v444, %v391
        %v446 = vadd.f32 %v442, %v445
        %v447 = vpack.c.bf16 %v446, %v446
        %s448 = scalar_lea.vmem %s320, 12 [#allocation9]
        %449 = vst [vmem:[%s448] sm:$0xf] %v447
        %s450 = smul.u32 4, 1
        %s451 = smul.u32 %s450, 1
        %s452 = sshll.u32 %s451, 4
        %453 = dma.done [#allocation2], %s452
        %s454 = sshll.u32 %s451, 4
        %455 = dma.done %s374, %s454
        %s456 = sand.u32 %s147, 1
        %s457 = scalar_lea.sflag [#allocation5], %s456
        %s458 = sand.u32 %s147, 1
        %s459 = smul.addr %s458, 16
        %s460 = scalar_lea.vmem [#allocation9], %s459
        %s461 = sand.u32 %s177, 1
        %s462 = scalar_lea.sflag [#allocation11], %s461
        %s463 = sand.u32 %s177, 1
        %s464 = smul.addr %s463, 8
        %s465 = scalar_lea.vmem [#allocation10], %s464
        // Predicated region
        $region45: #{tpu_custom_call.1} parent=31 // pred_check
          %p466 = pneg %p157
        $region46: #{tpu_custom_call.1} parent=31 // pred_check_branch
          %468 = sbr.rel (%p466) target = $region48
        $region47: #{tpu_custom_call.1} parent=31 // pred_region
          %s469 = smul.u32 4, %s37
          %s471 = ssub.s32 256, 256
          %472 = vsyncadd %s457, %s471
          %s473 = sadd.s32 %s36, %s469
          %s474 = smul.addr %s35, 4
          %s475 = sadd.s32 %s473, %s474
          %s476 = smul.addr %s475, 64
          %s477 = scalar_lea.hbm %s4, %s476
          %s478 = sshll.u32 %s460, 4
          %s479 = int_to_ptr.vmem [resolvable:$true] %s478
          %484 = dma.vmem_to_hbm [thread:$0]  %s479, 256, %s477, %s457, 64, 64, 4
        $region48: #{tpu_custom_call.1} parent=31 // pred_fallthru
          _
        // Predicated region
        $region49: #{tpu_custom_call.1} parent=31 // pred_check
          %p485 = pneg %p187
        $region50: #{tpu_custom_call.1} parent=31 // pred_check_branch
          %487 = sbr.rel (%p485) target = $region52
        $region51: #{tpu_custom_call.1} parent=31 // pred_region
          %s488 = smul.u32 2, %s37
          %s490 = ssub.s32 128, 128
          %491 = vsyncadd %s462, %s490
          %s492 = sadd.s32 %s36, %s488
          %s493 = smul.addr %s35, 2
          %s494 = sadd.s32 %s492, %s493
          %s495 = smul.addr %s494, 64
          %s496 = scalar_lea.hbm %s5, %s495
          %s497 = sshll.u32 %s465, 4
          %s498 = int_to_ptr.vmem [resolvable:$true] %s497
          %503 = dma.vmem_to_hbm [thread:$0]  %s498, 128, %s496, %s462, 64, 64, 4
        $region52: #{tpu_custom_call.1} parent=31 // pred_fallthru
          _
      $region32: #{tpu_custom_call.1} parent=5 // pred_fallthru
        _
      %p504 = scmp.le.s32.totalorder 2, %s25
      // Predicated region
      $region53: #{tpu_custom_call.1} parent=5 // pred_check
        %p505 = pneg %p504
      $region54: #{tpu_custom_call.1} parent=5 // pred_check_branch
        %507 = sbr.rel (%p505) target = $region56
      $region55: #{tpu_custom_call.1} parent=5 // pred_region
        %s508 = ssub.s32 %s25, 2
        // Predicated region
        $region57: #{tpu_custom_call.1} parent=55 // pred_check
          %p509 = pneg %p163
        $region58: #{tpu_custom_call.1} parent=55 // pred_check_branch
          %511 = sbr.rel (%p509) target = $region60
        $region59: #{tpu_custom_call.1} parent=55 // pred_region
          %s512 = sand.u32 %s148, 1
          %s513 = scalar_lea.sflag [#allocation5], %s512
          %s514 = sand.u32 %s148, 1
          %s515 = smul.addr %s514, 16
          %s516 = scalar_lea.vmem [#allocation9], %s515
          %517 = dma.done %s513, 256
        $region60: #{tpu_custom_call.1} parent=55 // pred_fallthru
          _
        // Predicated region
        $region61: #{tpu_custom_call.1} parent=55 // pred_check
          %p518 = pneg %p193
        $region62: #{tpu_custom_call.1} parent=55 // pred_check_branch
          %520 = sbr.rel (%p518) target = $region64
        $region63: #{tpu_custom_call.1} parent=55 // pred_region
          %s521 = sand.u32 %s178, 1
          %s522 = scalar_lea.sflag [#allocation11], %s521
          %s523 = sand.u32 %s178, 1
          %s524 = smul.addr %s523, 8
          %s525 = scalar_lea.vmem [#allocation10], %s524
          %526 = dma.done %s522, 128
        $region64: #{tpu_custom_call.1} parent=55 // pred_fallthru
          _
      $region56: #{tpu_custom_call.1} parent=5 // pred_fallthru
        _
    $region6: #{tpu_custom_call.1} parent=1 // loop_footer
      %s29 = sadd.s32 1, %s25
    $region7: #{tpu_custom_call.1} parent=1 // loop_footer_branch
      %24 = sbr.rel target = $region3
    $region8: #{tpu_custom_call.1} parent=1 // loop_exit
      _
    %527 = vsyncpa [#allocation4], 1
    %s528 = scalar_lea.sflag [#allocation4], 1
    %529 = vsyncpa %s528, 1
    %530 = vsyncpa [#allocation7], 1
    %s531 = scalar_lea.sflag [#allocation7], 1
    %532 = vsyncpa %s531, 1
    %533 = vsyncpa [#allocation5], 1
    %s534 = scalar_lea.sflag [#allocation5], 1
    %535 = vsyncpa %s534, 1
    %536 = vsyncpa [#allocation11], 1
    %s537 = scalar_lea.sflag [#allocation11], 1
    %538 = vsyncpa %s537, 1
  %539 = vsyncmov [#allocation2]
  %s540 = vpop.sfrf %539
  %p541 = scmp.eq.s32.totalorder %s540, 0
  %p542 = pneg %p541
  %544 = shalt.err (%p542)
  %s545 = scalar_lea.sflag [#allocation2], 1
  %546 = vsyncmov %s545
  %s547 = vpop.sfrf %546
  %p548 = scmp.eq.s32.totalorder %s547, 0
  %p549 = pneg %p548
  %551 = shalt.err (%p549)

</llo_original>
